<compile_context>
chip_gen: v7x
topology: tpu7x:2x2x1
jax: 0.10.0
libtpu: 0.0.40
codegen_flags: <defaults>
</compile_context>

<pallas_src>
import functools

import jax
import jax.numpy as jnp
from jax.experimental import pallas as pl
from jax.experimental.pallas import tpu as pltpu


_ACTIVATIONS = {
    "tanh": jnp.tanh,
    "relu": jax.nn.relu,
    "sigmoid": jax.nn.sigmoid,
}


def _round_up(x, m):
    return ((x + m - 1) // m) * m


def _cdiv(a, b):
    return (a + b - 1) // b


def _device_traits():
    """Best-effort (has_bf16_eup, tensorcores_per_chip) from device_kind."""
    try:
        kind = jax.devices()[0].device_kind.lower()
    except Exception:
        kind = ""
    has_bf16_eup = ("v6" in kind) or ("v7" in kind)   # v5e has no bf16 EUP/VPU
    num_tc = 2 if "v7" in kind else 1                 # v7x: 2 TCs/chip
    return has_bf16_eup, num_tc


def _choose_tiling(B, num_tc, max_tile_rows=2048):
    """Pick (batch_tile, B_pad): pad B to a 128 multiple, then split into the
    fewest balanced 128-aligned tiles (cap max_tile_rows). On 2-TC chips use an
    even number of steps >= 2 for B >= 256 so both cores get balanced work."""
    chunks = _cdiv(max(B, 1), 128)
    max_chunks = max(max_tile_rows // 128, 1)
    steps = _cdiv(chunks, max_chunks)
    if num_tc >= 2 and B >= 256:
        steps = max(steps, 2)
        if steps % 2:
            steps += 1
    tile_chunks = _cdiv(chunks, steps)
    batch_tile = tile_chunks * 128
    return batch_tile, steps * batch_tile


def _value_mlp_kernel(xT_ref, w1t_ref, b1_ref, w2t_ref, b2_ref, w3t_ref, o_ref,
                      *, activation, act_dtype):
    """Fused feature-major 3-layer MLP tile.

    (h0,in)@(in,bt) -> act -> (h1,h0)@(h0,bt) -> act -> (out,h1)@(h1,bt)

    Batch stays on the 128-lane axis throughout: no in-kernel transpose, and
    the output store is lane-dense. Matmuls accumulate in f32 on the MXU; the
    value-head bias is added in the wrapper.
    """
    w_dtype = w1t_ref.dtype
    h = jnp.dot(w1t_ref[...], xT_ref[...], preferred_element_type=jnp.float32)
    h = activation((h + b1_ref[...]).astype(act_dtype))
    h = jnp.dot(w2t_ref[...], h.astype(w_dtype),
                preferred_element_type=jnp.float32)
    h = activation((h + b2_ref[...]).astype(act_dtype))
    v = jnp.dot(w3t_ref[...], h.astype(w_dtype),
                preferred_element_type=jnp.float32)
    o_ref[...] = v.astype(o_ref.dtype)


def value_forward(x, params, *, batch_tile=None, compute_dtype=jnp.bfloat16,
                  activation="tanh"):
    """Fused MLP value-network forward pass.

    x: (B, num_inputs)
    params: dict with w1 (in,h0), b1 (1,h0), w2 (h0,h1), b2 (1,h1),
            w3 (h1,out), b3 (1,out)  -- weights in (in, out) layout.
    compute_dtype: jnp.bfloat16 (default; bf16 MXU, f32 accumulation) or
        jnp.float32 (near bit-exact vs. the reference).
    returns: (B, num_outputs) float32
    """
    act_fn = _ACTIVATIONS[activation]
    B, num_inputs = x.shape
    h0 = params["w1"].shape[1]
    h1 = params["w2"].shape[1]
    num_outputs = params["w3"].shape[1]

    has_bf16_eup, num_tc = _device_traits()

    if batch_tile is None:
        batch_tile, B_pad = _choose_tiling(B, num_tc)
    else:
        batch_tile = _round_up(batch_tile, 128)
        B_pad = _round_up(B, batch_tile)
    grid = (B_pad // batch_tile,)

    # bf16 transcendentals only when the EUP supports them (v6e/v7x) and the
    # next matmul downcasts to bf16 anyway; relu/ v5e stay f32.
    act_dtype = (jnp.bfloat16
                 if (has_bf16_eup
                     and compute_dtype == jnp.bfloat16
                     and activation in ("tanh", "sigmoid"))
                 else jnp.float32)

    # Feature-major operands: batch on the lane axis everywhere.
    if B_pad != B:
        x = jnp.pad(x, ((0, B_pad - B), (0, 0)))
    x_t = x.T.astype(compute_dtype)                           # (in,  B_pad)
    w1_t = params["w1"].T.astype(compute_dtype)               # (h0,  in)
    w2_t = params["w2"].T.astype(compute_dtype)               # (h1,  h0)
    w3_t = params["w3"].T.astype(compute_dtype)               # (out, h1)
    b1_c = params["b1"].reshape(h0, 1).astype(jnp.float32)    # (h0, 1)
    b2_c = params["b2"].reshape(h1, 1).astype(jnp.float32)    # (h1, 1)

    def rep(shape):
        # Full-array block, same block every grid step (stays resident).
        return pl.BlockSpec(shape, lambda i: (0, 0))

    itemsize = jnp.dtype(compute_dtype).itemsize
    weight_bytes = ((w1_t.size + w2_t.size + w3_t.size) * itemsize
                    + (b1_c.size + b2_c.size) * 4)
    cost = pl.CostEstimate(
        flops=2 * B_pad * (num_inputs * h0 + h0 * h1 + h1 * num_outputs),
        transcendentals=(B_pad * (h0 + h1)
                         if activation in ("tanh", "sigmoid") else 0),
        bytes_accessed=(B_pad * num_inputs * itemsize
                        + B_pad * num_outputs * 4
                        + weight_bytes),
    )

    out_t = pl.pallas_call(
        functools.partial(_value_mlp_kernel, activation=act_fn,
                          act_dtype=act_dtype),
        out_shape=jax.ShapeDtypeStruct((num_outputs, B_pad), jnp.float32),
        grid_spec=pltpu.PrefetchScalarGridSpec(
            num_scalar_prefetch=0,
            grid=grid,
            in_specs=[
                pl.BlockSpec((num_inputs, batch_tile), lambda i: (0, i)),
                rep((h0, num_inputs)),
                rep((h0, 1)),
                rep((h1, h0)),
                rep((h1, 1)),
                rep((num_outputs, h1)),
            ],
            out_specs=pl.BlockSpec((num_outputs, batch_tile),
                                   lambda i: (0, i)),
        ),
        compiler_params=pltpu.CompilerParams(
            dimension_semantics=("parallel",)),
        cost_estimate=cost,
    )(x_t, w1_t, b1_c, w2_t, b2_c, w3_t)

    # (out, B_pad) -> (B, out); tiny slab transpose is layout plumbing. The
    # value-head bias (dropped from the kernel) is added here.
    b3 = params["b3"].reshape(1, num_outputs).astype(jnp.float32)
    return out_t[:, :B].T + b3


def init_value_params(key, num_inputs, hidden_size=(128, 128), num_outputs=1):
    """Mirror nn.Linear default init (uniform +/- 1/sqrt(fan_in)), then
    value_head.weight *= 0.1, value_head.bias *= 0.0."""
    dims = [num_inputs, *hidden_size, num_outputs]
    keys = jax.random.split(key, 2 * (len(dims) - 1))
    params = {}
    for li in range(len(dims) - 1):
        fan_in, fan_out = dims[li], dims[li + 1]
        bound = 1.0 / jnp.sqrt(fan_in)
        w = jax.random.uniform(keys[2 * li], (fan_in, fan_out),
                               minval=-bound, maxval=bound, dtype=jnp.float32)
        b = jax.random.uniform(keys[2 * li + 1], (1, fan_out),
                               minval=-bound, maxval=bound, dtype=jnp.float32)
        if li == len(dims) - 2:  # value head
            w = w * 0.1
            b = b * 0.0
        params[f"w{li + 1}"] = w
        params[f"b{li + 1}"] = b
    return params


def value_forward_ref(x, params, activation="tanh"):
    """Pure-JAX reference for correctness checking."""
    act_fn = _ACTIVATIONS[activation]
    h = act_fn(x @ params["w1"] + params["b1"])
    h = act_fn(h @ params["w2"] + params["b2"])
    return h @ params["w3"] + params["b3"]


if __name__ == "__main__":
    key = jax.random.PRNGKey(0)
    k_x, k_p = jax.random.split(key)

    batch = 200                 # deliberately not a 128 multiple (padding path)
    num_inputs = 32
    hidden_size = (128, 128)    # PyTorch module default
    num_outputs = 1

    x = jax.random.normal(k_x, (batch, num_inputs), dtype=jnp.float32)
    params = init_value_params(k_p, num_inputs, hidden_size, num_outputs)
    ref = value_forward_ref(x, params)

    # f32 compute path: tight tolerance vs. reference.
    out_f32 = jax.block_until_ready(
        value_forward(x, params, compute_dtype=jnp.float32))
    assert out_f32.shape == (batch, num_outputs), out_f32.shape
    assert jnp.allclose(out_f32, ref, atol=1e-4, rtol=1e-4), (
        float(jnp.max(jnp.abs(out_f32 - ref))))

    # Default bf16 compute path (MXU/EUP fast path): loose tolerance.
    out = jax.block_until_ready(value_forward(x, params))
    assert out.shape == (batch, num_outputs), out.shape
    assert jnp.allclose(out, ref, atol=2e-2, rtol=2e-2), (
        float(jnp.max(jnp.abs(out - ref))))

    print("KERNEL_OK")
</pallas_src>

<mosaic_0001>
module attributes {stable_mosaic.version = 11 : i64} {
  func.func @_value_mlp_kernel(%arg0: i32, %arg1: memref<32x256xf32, #tpu.memory_space<vmem>>, %arg2: memref<128x32xf32, #tpu.memory_space<vmem>>, %arg3: memref<128x1xf32, #tpu.memory_space<vmem>>, %arg4: memref<128x128xf32, #tpu.memory_space<vmem>>, %arg5: memref<128x1xf32, #tpu.memory_space<vmem>>, %arg6: memref<1x128xf32, #tpu.memory_space<vmem>>, %arg7: memref<1x256xf32, #tpu.memory_space<vmem>>) attributes {dimension_semantics = [#tpu.dimension_semantics<parallel>], iteration_bounds = array<i64: 1>, scalar_prefetch = 0 : i64, scratch_operands = 0 : i64, tpu.core_type = #tpu.core_type<tc>, window_params = [{transform_indices = @transform_0, window_bounds = array<i64: 32, 256>}, {pipeline_mode = #tpu.pipeline_mode<synchronous>, transform_indices = @transform_1, window_bounds = array<i64: 128, 32>}, {pipeline_mode = #tpu.pipeline_mode<synchronous>, transform_indices = @transform_2, window_bounds = array<i64: 128, 1>}, {pipeline_mode = #tpu.pipeline_mode<synchronous>, transform_indices = @transform_3, window_bounds = array<i64: 128, 128>}, {pipeline_mode = #tpu.pipeline_mode<synchronous>, transform_indices = @transform_4, window_bounds = array<i64: 128, 1>}, {pipeline_mode = #tpu.pipeline_mode<synchronous>, transform_indices = @transform_5, window_bounds = array<i64: 1, 128>}, {transform_indices = @transform_6, window_bounds = array<i64: 1, 256>}]} {
    %c0 = arith.constant 0 : index
    %c0_0 = arith.constant 0 : index
    %0 = vector.load %arg2[%c0, %c0_0] : memref<128x32xf32, #tpu.memory_space<vmem>>, vector<128x32xf32>
    %c0_1 = arith.constant 0 : index
    %c0_2 = arith.constant 0 : index
    %1 = vector.load %arg1[%c0_1, %c0_2] : memref<32x256xf32, #tpu.memory_space<vmem>>, vector<32x256xf32>
    %cst = arith.constant dense<0.000000e+00> : vector<128x256xf32>
    %2 = tpu.matmul %0, %1, %cst {dimension_numbers = #tpu.dot_dimension_numbers<[1], [0], [0], [1], [0, 0, 1, 1], [], []>} : vector<128x32xf32>, vector<32x256xf32>, vector<128x256xf32> -> vector<128x256xf32>
    %c0_3 = arith.constant 0 : index
    %c0_4 = arith.constant 0 : index
    %3 = vector.load %arg3[%c0_3, %c0_4] : memref<128x1xf32, #tpu.memory_space<vmem>>, vector<128x1xf32>
    %4 = vector.broadcast %3 : vector<128x1xf32> to vector<128x256xf32>
    %5 = arith.addf %2, %4 : vector<128x256xf32>
    %6 = math.tanh %5 : vector<128x256xf32>
    %c0_5 = arith.constant 0 : index
    %c0_6 = arith.constant 0 : index
    %7 = vector.load %arg4[%c0_5, %c0_6] : memref<128x128xf32, #tpu.memory_space<vmem>>, vector<128x128xf32>
    %cst_7 = arith.constant dense<0.000000e+00> : vector<128x256xf32>
    %8 = tpu.matmul %7, %6, %cst_7 {dimension_numbers = #tpu.dot_dimension_numbers<[1], [0], [0], [1], [0, 0, 1, 1], [], []>} : vector<128x128xf32>, vector<128x256xf32>, vector<128x256xf32> -> vector<128x256xf32>
    %c0_8 = arith.constant 0 : index
    %c0_9 = arith.constant 0 : index
    %9 = vector.load %arg5[%c0_8, %c0_9] : memref<128x1xf32, #tpu.memory_space<vmem>>, vector<128x1xf32>
    %10 = vector.broadcast %9 : vector<128x1xf32> to vector<128x256xf32>
    %11 = arith.addf %8, %10 : vector<128x256xf32>
    %12 = math.tanh %11 : vector<128x256xf32>
    %c0_10 = arith.constant 0 : index
    %c0_11 = arith.constant 0 : index
    %13 = vector.load %arg6[%c0_10, %c0_11] : memref<1x128xf32, #tpu.memory_space<vmem>>, vector<1x128xf32>
    %cst_12 = arith.constant dense<0.000000e+00> : vector<1x256xf32>
    %14 = tpu.matmul %13, %12, %cst_12 {dimension_numbers = #tpu.dot_dimension_numbers<[1], [0], [0], [1], [0, 0, 1, 1], [], []>} : vector<1x128xf32>, vector<128x256xf32>, vector<1x256xf32> -> vector<1x256xf32>
    %c0_13 = arith.constant 0 : index
    %c0_14 = arith.constant 0 : index
    %15 = vector.load %arg7[%c0_13, %c0_14] : memref<1x256xf32, #tpu.memory_space<vmem>>, vector<1x256xf32>
    tpu.vector_store %arg7[%c0_13, %c0_14], %14 {strides = array<i32>} : memref<1x256xf32, #tpu.memory_space<vmem>>, vector<1x256xf32>,
    return
  }
  func.func @transform_0(%arg0: i32) -> (i32, i32) {
    %c0_i32 = arith.constant 0 : i32
    %c0_i32_0 = arith.constant 0 : i32
    return %c0_i32, %arg0 : i32, i32
  }
  func.func @transform_1(%arg0: i32) -> (i32, i32) {
    %c0_i32 = arith.constant 0 : i32
    %c0_i32_0 = arith.constant 0 : i32
    %c0_i32_1 = arith.constant 0 : i32
    return %c0_i32, %c0_i32_0 : i32, i32
  }
  func.func @transform_2(%arg0: i32) -> (i32, i32) {
    %c0_i32 = arith.constant 0 : i32
    %c0_i32_0 = arith.constant 0 : i32
    %c0_i32_1 = arith.constant 0 : i32
    return %c0_i32, %c0_i32_0 : i32, i32
  }
  func.func @transform_3(%arg0: i32) -> (i32, i32) {
    %c0_i32 = arith.constant 0 : i32
    %c0_i32_0 = arith.constant 0 : i32
    %c0_i32_1 = arith.constant 0 : i32
    return %c0_i32, %c0_i32_0 : i32, i32
  }
  func.func @transform_4(%arg0: i32) -> (i32, i32) {
    %c0_i32 = arith.constant 0 : i32
    %c0_i32_0 = arith.constant 0 : i32
    %c0_i32_1 = arith.constant 0 : i32
    return %c0_i32, %c0_i32_0 : i32, i32
  }
  func.func @transform_5(%arg0: i32) -> (i32, i32) {
    %c0_i32 = arith.constant 0 : i32
    %c0_i32_0 = arith.constant 0 : i32
    %c0_i32_1 = arith.constant 0 : i32
    return %c0_i32, %c0_i32_0 : i32, i32
  }
  func.func @transform_6(%arg0: i32) -> (i32, i32) {
    %c0_i32 = arith.constant 0 : i32
    %c0_i32_0 = arith.constant 0 : i32
    return %c0_i32, %arg0 : i32, i32
  }
}

</mosaic_0001>

<llo_original>
// kernel: tpu_custom_call.1
$region0: #{tpu_custom_call.1}
  #allocation0 [shape = 'u32[]', space=smem, size = 0x4, offset = 0x4, fixed_abs, tag = 'smem constant byte address 0x4 - core index']
  #allocation1 [shape = 'u32[144,128]{1,0:T(1,128)}', space=vmem, size = 0x12000, scoped, tag = 'internal scratch']
  %s0 = inlined_call_operand.vmem [shape: f32[32,256], index: 0, kind: input, shape index: {}]
  %s1 = inlined_call_operand.vmem [shape: f32[128,32], index: 1, kind: input, shape index: {}]
  %s2 = inlined_call_operand.vmem [shape: f32[128,1], index: 2, kind: input, shape index: {}]
  %s3 = inlined_call_operand.vmem [shape: f32[128,128], index: 3, kind: input, shape index: {}]
  %s4 = inlined_call_operand.vmem [shape: f32[128,1], index: 4, kind: input, shape index: {}]
  %s5 = inlined_call_operand.vmem [shape: f32[1,128], index: 5, kind: input, shape index: {}]
  %s6 = inlined_call_operand.hbm [shape: f32[1,256], index: 6, kind: output, shape index: {}]
  %s7 = sld [smem:[#allocation0]]
  $region34: #{tpu_custom_call.1} parent=0
    _
  %s9 = ssub.s32 1, %s7
  %s10 = scalar_select 0, %s9, %s7
  $region1: #{tpu_custom_call.1} parent=0
    #allocation2 [shape = 'u8[1024]{0}', space=vmem, size = 0x400, scoped, tag = 'output window, operand 0, single buffered']
    #allocation3 [shape = 's32[1]{0}', space=sflag, size = 0x4, scoped, tag = 'scoped memory for tpu_custom_call.1']
    %11 = vsyncpa [#allocation3], 0
    // Predicated region
    $region2: #{tpu_custom_call.1} parent=1 // pred_check
      _
    $region3: #{tpu_custom_call.1} parent=1 // pred_check_branch
      %13 = sbr.rel (0) target = $region5
    $region4: #{tpu_custom_call.1} parent=1 // pred_region
      _
    $region5: #{tpu_custom_call.1} parent=1 // pred_fallthru
      _
    // Predicated region
    $region6: #{tpu_custom_call.1} parent=1 // pred_check
      _
    $region7: #{tpu_custom_call.1} parent=1 // pred_check_branch
      %15 = sbr.rel (0) target = $region9
    $region8: #{tpu_custom_call.1} parent=1 // pred_region
      _
    $region9: #{tpu_custom_call.1} parent=1 // pred_fallthru
      _
    // Predicated region
    $region10: #{tpu_custom_call.1} parent=1 // pred_check
      _
    $region11: #{tpu_custom_call.1} parent=1 // pred_check_branch
      %17 = sbr.rel (0) target = $region13
    $region12: #{tpu_custom_call.1} parent=1 // pred_region
      _
    $region13: #{tpu_custom_call.1} parent=1 // pred_fallthru
      _
    // Predicated region
    $region14: #{tpu_custom_call.1} parent=1 // pred_check
      _
    $region15: #{tpu_custom_call.1} parent=1 // pred_check_branch
      %19 = sbr.rel (0) target = $region17
    $region16: #{tpu_custom_call.1} parent=1 // pred_region
      _
    $region17: #{tpu_custom_call.1} parent=1 // pred_fallthru
      _
    // Predicated region
    $region18: #{tpu_custom_call.1} parent=1 // pred_check
      _
    $region19: #{tpu_custom_call.1} parent=1 // pred_check_branch
      %21 = sbr.rel (0) target = $region21
    $region20: #{tpu_custom_call.1} parent=1 // pred_region
      _
    $region21: #{tpu_custom_call.1} parent=1 // pred_fallthru
      _
    // Predicated region
    $region22: #{tpu_custom_call.1} parent=1 // pred_check
      _
    $region23: #{tpu_custom_call.1} parent=1 // pred_check_branch
      %23 = sbr.rel (0) target = $region25
    $region24: #{tpu_custom_call.1} parent=1 // pred_region
      _
    $region25: #{tpu_custom_call.1} parent=1 // pred_fallthru
      _
    %v24 = vld [vmem:[%s1] sm:$0xff]
    %v25 = vld [vmem:[%s1 + $0x8] sm:$0xff]
    %v26 = vld [vmem:[%s1 + $0x10] sm:$0xff]
    %v27 = vld [vmem:[%s1 + $0x18] sm:$0xff]
    %v28 = vld [vmem:[%s1 + $0x20] sm:$0xff]
    %v29 = vld [vmem:[%s1 + $0x28] sm:$0xff]
    %v30 = vld [vmem:[%s1 + $0x30] sm:$0xff]
    %v31 = vld [vmem:[%s1 + $0x38] sm:$0xff]
    %v32 = vld [vmem:[%s1 + $0x40] sm:$0xff]
    %v33 = vld [vmem:[%s1 + $0x48] sm:$0xff]
    %v34 = vld [vmem:[%s1 + $0x50] sm:$0xff]
    %v35 = vld [vmem:[%s1 + $0x58] sm:$0xff]
    %v36 = vld [vmem:[%s1 + $0x60] sm:$0xff]
    %v37 = vld [vmem:[%s1 + $0x68] sm:$0xff]
    %v38 = vld [vmem:[%s1 + $0x70] sm:$0xff]
    %v39 = vld [vmem:[%s1 + $0x78] sm:$0xff]
    %v40 = vld [vmem:[%s0] sm:$0xff]
    %v41 = vld [vmem:[%s0 + $0x8] sm:$0xff]
    %v42 = vld [vmem:[%s0 + $0x10] sm:$0xff]
    %v43 = vld [vmem:[%s0 + $0x18] sm:$0xff]
    %v44 = vld [vmem:[%s0 + $0x20] sm:$0xff]
    %v45 = vld [vmem:[%s0 + $0x28] sm:$0xff]
    %v46 = vld [vmem:[%s0 + $0x30] sm:$0xff]
    %v47 = vld [vmem:[%s0 + $0x38] sm:$0xff]
    %v48 = vld [vmem:[%s2] sm:$0xff]
    %v49 = vld [vmem:[%s2 + $0x8] sm:$0xff]
    %v50 = vld [vmem:[%s2 + $0x10] sm:$0xff]
    %v51 = vld [vmem:[%s2 + $0x18] sm:$0xff]
    %v52 = vld [vmem:[%s2 + $0x20] sm:$0xff]
    %v53 = vld [vmem:[%s2 + $0x28] sm:$0xff]
    %v54 = vld [vmem:[%s2 + $0x30] sm:$0xff]
    %v55 = vld [vmem:[%s2 + $0x38] sm:$0xff]
    %v56 = vld [vmem:[%s2 + $0x40] sm:$0xff]
    %v57 = vld [vmem:[%s2 + $0x48] sm:$0xff]
    %v58 = vld [vmem:[%s2 + $0x50] sm:$0xff]
    %v59 = vld [vmem:[%s2 + $0x58] sm:$0xff]
    %v60 = vld [vmem:[%s2 + $0x60] sm:$0xff]
    %v61 = vld [vmem:[%s2 + $0x68] sm:$0xff]
    %v62 = vld [vmem:[%s2 + $0x70] sm:$0xff]
    %v63 = vld [vmem:[%s2 + $0x78] sm:$0xff]
    %65 = vset.pattern.permute.xlu0 0
    %66 = vperm.xlu0 %65, %v48
    %v67 = vpop.permute.xlu0 %66
    %70 = vset.pattern.permute.xlu0 0
    %71 = vperm.xlu0 %70, %v49
    %v72 = vpop.permute.xlu0 %71
    %75 = vset.pattern.permute.xlu0 0
    %76 = vperm.xlu0 %75, %v50
    %v77 = vpop.permute.xlu0 %76
    %80 = vset.pattern.permute.xlu0 0
    %81 = vperm.xlu0 %80, %v51
    %v82 = vpop.permute.xlu0 %81
    %85 = vset.pattern.permute.xlu0 0
    %86 = vperm.xlu0 %85, %v52
    %v87 = vpop.permute.xlu0 %86
    %90 = vset.pattern.permute.xlu0 0
    %91 = vperm.xlu0 %90, %v53
    %v92 = vpop.permute.xlu0 %91
    %95 = vset.pattern.permute.xlu0 0
    %96 = vperm.xlu0 %95, %v54
    %v97 = vpop.permute.xlu0 %96
    %100 = vset.pattern.permute.xlu0 0
    %101 = vperm.xlu0 %100, %v55
    %v102 = vpop.permute.xlu0 %101
    %105 = vset.pattern.permute.xlu0 0
    %106 = vperm.xlu0 %105, %v56
    %v107 = vpop.permute.xlu0 %106
    %110 = vset.pattern.permute.xlu0 0
    %111 = vperm.xlu0 %110, %v57
    %v112 = vpop.permute.xlu0 %111
    %115 = vset.pattern.permute.xlu0 0
    %116 = vperm.xlu0 %115, %v58
    %v117 = vpop.permute.xlu0 %116
    %120 = vset.pattern.permute.xlu0 0
    %121 = vperm.xlu0 %120, %v59
    %v122 = vpop.permute.xlu0 %121
    %125 = vset.pattern.permute.xlu0 0
    %126 = vperm.xlu0 %125, %v60
    %v127 = vpop.permute.xlu0 %126
    %130 = vset.pattern.permute.xlu0 0
    %131 = vperm.xlu0 %130, %v61
    %v132 = vpop.permute.xlu0 %131
    %135 = vset.pattern.permute.xlu0 0
    %136 = vperm.xlu0 %135, %v62
    %v137 = vpop.permute.xlu0 %136
    %140 = vset.pattern.permute.xlu0 0
    %141 = vperm.xlu0 %140, %v63
    %v142 = vpop.permute.xlu0 %141
    %vm144 = vcmask 261120
    %v146 = vsel %vm144, %v24, 0
    %v149 = vsel %vm144, %v25, 0
    %v152 = vsel %vm144, %v26, 0
    %v155 = vsel %vm144, %v27, 0
    %v158 = vsel %vm144, %v28, 0
    %v161 = vsel %vm144, %v29, 0
    %v164 = vsel %vm144, %v30, 0
    %v167 = vsel %vm144, %v31, 0
    %v170 = vsel %vm144, %v32, 0
    %v173 = vsel %vm144, %v33, 0
    %v176 = vsel %vm144, %v34, 0
    %v179 = vsel %vm144, %v35, 0
    %v182 = vsel %vm144, %v36, 0
    %v185 = vsel %vm144, %v37, 0
    %v188 = vsel %vm144, %v38, 0
    %v191 = vsel %vm144, %v39, 0
    %193 = vmatprep.subr.mxu0 %v41
    %194 = vmatpush1.msra.mxu0 %v40
    %195 = vmatprep.subr.mxu0 %v43
    %196 = vmatpush1.msra.mxu0 %v42
    %197 = vmatprep.subr.mxu0 %v45
    %198 = vmatpush1.msra.mxu0 %v44
    %199 = vmatprep.subr.mxu0 %v47
    %200 = vmatpush1.msra.mxu0 %v46
    %201 = vmatprep.subr.mxu0 0.0
    %202 = vmatpush1.msra.mxu0 0.0
    %203 = vmatprep.subr.mxu0 0.0
    %204 = vmatpush1.msra.mxu0 0.0
    %205 = vmatprep.subr.mxu0 0.0
    %206 = vmatpush1.msra.mxu0 0.0
    %207 = vmatprep.subr.mxu0 0.0
    %208 = vmatpush1.msra.mxu0 0.0
    %209 = vmatprep.subr.mxu0 0.0
    %210 = vmatpush1.msra.mxu0 0.0
    %211 = vmatprep.subr.mxu0 0.0
    %212 = vmatpush1.msra.mxu0 0.0
    %213 = vmatprep.subr.mxu0 0.0
    %214 = vmatpush1.msra.mxu0 0.0
    %215 = vmatprep.subr.mxu0 0.0
    %216 = vmatpush1.msra.mxu0 0.0
    %217 = vmatprep.subr.mxu0 0.0
    %218 = vmatpush1.msra.mxu0 0.0
    %219 = vmatprep.subr.mxu0 0.0
    %220 = vmatpush1.msra.mxu0 0.0
    %221 = vmatprep.subr.mxu0 0.0
    %222 = vmatpush1.msra.mxu0 0.0
    %223 = vmatprep.subr.mxu0 0.0
    %224 = vmatpush1.msra.mxu0 0.0
    %225 = vmatprep.subr.mxu0 0.0
    %226 = vmatpush1.msra.mxu0 0.0
    %227 = vmatprep.subr.mxu0 0.0
    %228 = vmatpush1.msra.mxu0 0.0
    %229 = vmatprep.subr.mxu0 0.0
    %230 = vmatpush1.msra.mxu0 0.0
    %231 = vmatprep.subr.mxu0 0.0
    %232 = vmatpush1.msra.mxu0 0.0
    %233 = vmatprep.subr.mxu0 0.0
    %234 = vmatpush1.msra.mxu0 0.0
    %235 = vmatprep.subr.mxu0 0.0
    %236 = vmatpush1.msra.mxu0 0.0
    %237 = vmatprep.subr.mxu0 0.0
    %238 = vmatpush1.msra.mxu0 0.0
    %239 = vmatprep.subr.mxu0 0.0
    %240 = vmatpush1.msra.mxu0 0.0
    %241 = vmatprep.subr.mxu0 0.0
    %242 = vmatpush1.msra.mxu0 0.0
    %243 = vmatprep.subr.mxu0 0.0
    %244 = vmatpush1.msra.mxu0 0.0
    %245 = vmatprep.subr.mxu0 0.0
    %246 = vmatpush1.msra.mxu0 0.0
    %247 = vmatprep.subr.mxu0 0.0
    %248 = vmatpush1.msra.mxu0 0.0
    %249 = vmatprep.subr.mxu0 0.0
    %250 = vmatpush1.msra.mxu0 0.0
    %251 = vmatprep.subr.mxu0 0.0
    %252 = vmatpush1.msra.mxu0 0.0
    %253 = vmatprep.subr.mxu0 0.0
    %254 = vmatpush1.msra.mxu0 0.0
    %255 = vmatprep.subr.mxu0 0.0
    %256 = vmatpush1.msra.mxu0 0.0
    %257 = vmatprep.mubr.f32.mxu0 0.0
    %258 = vmatmul.mubr.f32.gmra.mrb[0].mxu0 %v146
    %v259 = vpop.f32.mrb[0].mxu0
    %v260 = vadd.f32 %v67, %v259
    %v261 = vpop.f32.mrb[0].mxu0
    %v262 = vadd.f32 %v67, %v261
    %263 = vmatprep.mubr.f32.mxu0 0.0
    %264 = vmatmul.mubr.f32.gmra.mrb[0].mxu0 %v149
    %v265 = vpop.f32.mrb[0].mxu0
    %v266 = vadd.f32 %v72, %v265
    %v267 = vpop.f32.mrb[0].mxu0
    %v268 = vadd.f32 %v72, %v267
    %269 = vmatprep.mubr.f32.mxu0 0.0
    %270 = vmatmul.mubr.f32.gmra.mrb[0].mxu0 %v152
    %v271 = vpop.f32.mrb[0].mxu0
    %v272 = vadd.f32 %v77, %v271
    %v273 = vpop.f32.mrb[0].mxu0
    %v274 = vadd.f32 %v77, %v273
    %275 = vmatprep.mubr.f32.mxu0 0.0
    %276 = vmatmul.mubr.f32.gmra.mrb[0].mxu0 %v155
    %v277 = vpop.f32.mrb[0].mxu0
    %v278 = vadd.f32 %v82, %v277
    %v279 = vpop.f32.mrb[0].mxu0
    %v280 = vadd.f32 %v82, %v279
    %281 = vmatprep.mubr.f32.mxu0 0.0
    %282 = vmatmul.mubr.f32.gmra.mrb[0].mxu0 %v158
    %v283 = vpop.f32.mrb[0].mxu0
    %v284 = vadd.f32 %v87, %v283
    %v285 = vpop.f32.mrb[0].mxu0
    %v286 = vadd.f32 %v87, %v285
    %287 = vmatprep.mubr.f32.mxu0 0.0
    %288 = vmatmul.mubr.f32.gmra.mrb[0].mxu0 %v161
    %v289 = vpop.f32.mrb[0].mxu0
    %v290 = vadd.f32 %v92, %v289
    %v291 = vpop.f32.mrb[0].mxu0
    %v292 = vadd.f32 %v92, %v291
    %293 = vmatprep.mubr.f32.mxu0 0.0
    %294 = vmatmul.mubr.f32.gmra.mrb[0].mxu0 %v164
    %v295 = vpop.f32.mrb[0].mxu0
    %v296 = vadd.f32 %v97, %v295
    %v297 = vpop.f32.mrb[0].mxu0
    %v298 = vadd.f32 %v97, %v297
    %299 = vmatprep.mubr.f32.mxu0 0.0
    %300 = vmatmul.mubr.f32.gmra.mrb[0].mxu0 %v167
    %v301 = vpop.f32.mrb[0].mxu0
    %v302 = vadd.f32 %v102, %v301
    %v303 = vpop.f32.mrb[0].mxu0
    %v304 = vadd.f32 %v102, %v303
    %305 = vmatprep.mubr.f32.mxu0 0.0
    %306 = vmatmul.mubr.f32.gmra.mrb[0].mxu0 %v170
    %v307 = vpop.f32.mrb[0].mxu0
    %v308 = vadd.f32 %v107, %v307
    %v309 = vpop.f32.mrb[0].mxu0
    %v310 = vadd.f32 %v107, %v309
    %311 = vmatprep.mubr.f32.mxu0 0.0
    %312 = vmatmul.mubr.f32.gmra.mrb[0].mxu0 %v173
    %v313 = vpop.f32.mrb[0].mxu0
    %v314 = vadd.f32 %v112, %v313
    %v315 = vpop.f32.mrb[0].mxu0
    %v316 = vadd.f32 %v112, %v315
    %317 = vmatprep.mubr.f32.mxu0 0.0
    %318 = vmatmul.mubr.f32.gmra.mrb[0].mxu0 %v176
    %v319 = vpop.f32.mrb[0].mxu0
    %v320 = vadd.f32 %v117, %v319
    %v321 = vpop.f32.mrb[0].mxu0
    %v322 = vadd.f32 %v117, %v321
    %323 = vmatprep.mubr.f32.mxu0 0.0
    %324 = vmatmul.mubr.f32.gmra.mrb[0].mxu0 %v179
    %v325 = vpop.f32.mrb[0].mxu0
    %v326 = vadd.f32 %v122, %v325
    %v327 = vpop.f32.mrb[0].mxu0
    %v328 = vadd.f32 %v122, %v327
    %329 = vmatprep.mubr.f32.mxu0 0.0
    %330 = vmatmul.mubr.f32.gmra.mrb[0].mxu0 %v182
    %v331 = vpop.f32.mrb[0].mxu0
    %v332 = vadd.f32 %v127, %v331
    %v333 = vpop.f32.mrb[0].mxu0
    %v334 = vadd.f32 %v127, %v333
    %335 = vmatprep.mubr.f32.mxu0 0.0
    %336 = vmatmul.mubr.f32.gmra.mrb[0].mxu0 %v185
    %v337 = vpop.f32.mrb[0].mxu0
    %v338 = vadd.f32 %v132, %v337
    %v339 = vpop.f32.mrb[0].mxu0
    %v340 = vadd.f32 %v132, %v339
    %341 = vmatprep.mubr.f32.mxu0 0.0
    %342 = vmatmul.mubr.f32.gmra.mrb[0].mxu0 %v188
    %v343 = vpop.f32.mrb[0].mxu0
    %v344 = vadd.f32 %v137, %v343
    %v345 = vpop.f32.mrb[0].mxu0
    %v346 = vadd.f32 %v137, %v345
    %347 = vmatprep.mubr.f32.mxu0 0.0
    %348 = vmatmul.mubr.f32.gmra.mrb[0].mxu0 %v191
    %v349 = vpop.f32.mrb[0].mxu0
    %v350 = vadd.f32 %v142, %v349
    %v351 = vpop.f32.mrb[0].mxu0
    %v352 = vadd.f32 %v142, %v351
    %353 = vdwg.mxu0
    %v354 = vtanh.pop %v260
    %v355 = vtanh.pop %v262
    %v356 = vtanh.pop %v266
    %v357 = vtanh.pop %v268
    %v358 = vtanh.pop %v272
    %v359 = vtanh.pop %v274
    %v360 = vtanh.pop %v278
    %v361 = vtanh.pop %v280
    %v362 = vtanh.pop %v284
    %v363 = vtanh.pop %v286
    %v364 = vtanh.pop %v290
    %v365 = vtanh.pop %v292
    %v366 = vtanh.pop %v296
    %v367 = vtanh.pop %v298
    %v368 = vtanh.pop %v302
    %v369 = vtanh.pop %v304
    %v370 = vtanh.pop %v308
    %v371 = vtanh.pop %v310
    %v372 = vtanh.pop %v314
    %v373 = vtanh.pop %v316
    %v374 = vtanh.pop %v320
    %v375 = vtanh.pop %v322
    %v376 = vtanh.pop %v326
    %v377 = vtanh.pop %v328
    %v378 = vtanh.pop %v332
    %v379 = vtanh.pop %v334
    %v380 = vtanh.pop %v338
    %v381 = vtanh.pop %v340
    %v382 = vtanh.pop %v344
    %v383 = vtanh.pop %v346
    %v384 = vtanh.pop %v350
    %v385 = vtanh.pop %v352
    %v386 = vld [vmem:[%s3] sm:$0xff]
    %v387 = vld [vmem:[%s3 + $0x8] sm:$0xff]
    %v388 = vld [vmem:[%s3 + $0x10] sm:$0xff]
    %v389 = vld [vmem:[%s3 + $0x18] sm:$0xff]
    %v390 = vld [vmem:[%s3 + $0x20] sm:$0xff]
    %v391 = vld [vmem:[%s3 + $0x28] sm:$0xff]
    %v392 = vld [vmem:[%s3 + $0x30] sm:$0xff]
    %v393 = vld [vmem:[%s3 + $0x38] sm:$0xff]
    %v394 = vld [vmem:[%s3 + $0x40] sm:$0xff]
    %v395 = vld [vmem:[%s3 + $0x48] sm:$0xff]
    %v396 = vld [vmem:[%s3 + $0x50] sm:$0xff]
    %v397 = vld [vmem:[%s3 + $0x58] sm:$0xff]
    %v398 = vld [vmem:[%s3 + $0x60] sm:$0xff]
    %v399 = vld [vmem:[%s3 + $0x68] sm:$0xff]
    %v400 = vld [vmem:[%s3 + $0x70] sm:$0xff]
    %v401 = vld [vmem:[%s3 + $0x78] sm:$0xff]
    %v402 = vld [vmem:[%s4] sm:$0xff]
    %v403 = vld [vmem:[%s4 + $0x8] sm:$0xff]
    %v404 = vld [vmem:[%s4 + $0x10] sm:$0xff]
    %v405 = vld [vmem:[%s4 + $0x18] sm:$0xff]
    %v406 = vld [vmem:[%s4 + $0x20] sm:$0xff]
    %v407 = vld [vmem:[%s4 + $0x28] sm:$0xff]
    %v408 = vld [vmem:[%s4 + $0x30] sm:$0xff]
    %v409 = vld [vmem:[%s4 + $0x38] sm:$0xff]
    %v410 = vld [vmem:[%s4 + $0x40] sm:$0xff]
    %v411 = vld [vmem:[%s4 + $0x48] sm:$0xff]
    %v412 = vld [vmem:[%s4 + $0x50] sm:$0xff]
    %v413 = vld [vmem:[%s4 + $0x58] sm:$0xff]
    %v414 = vld [vmem:[%s4 + $0x60] sm:$0xff]
    %v415 = vld [vmem:[%s4 + $0x68] sm:$0xff]
    %v416 = vld [vmem:[%s4 + $0x70] sm:$0xff]
    %v417 = vld [vmem:[%s4 + $0x78] sm:$0xff]
    %419 = vset.pattern.permute.xlu0 0
    %420 = vperm.xlu0 %419, %v402
    %v421 = vpop.permute.xlu0 %420
    %424 = vset.pattern.permute.xlu0 0
    %425 = vperm.xlu0 %424, %v403
    %v426 = vpop.permute.xlu0 %425
    %429 = vset.pattern.permute.xlu0 0
    %430 = vperm.xlu0 %429, %v404
    %v431 = vpop.permute.xlu0 %430
    %434 = vset.pattern.permute.xlu0 0
    %435 = vperm.xlu0 %434, %v405
    %v436 = vpop.permute.xlu0 %435
    %439 = vset.pattern.permute.xlu0 0
    %440 = vperm.xlu0 %439, %v406
    %v441 = vpop.permute.xlu0 %440
    %444 = vset.pattern.permute.xlu0 0
    %445 = vperm.xlu0 %444, %v407
    %v446 = vpop.permute.xlu0 %445
    %449 = vset.pattern.permute.xlu0 0
    %450 = vperm.xlu0 %449, %v408
    %v451 = vpop.permute.xlu0 %450
    %454 = vset.pattern.permute.xlu0 0
    %455 = vperm.xlu0 %454, %v409
    %v456 = vpop.permute.xlu0 %455
    %459 = vset.pattern.permute.xlu0 0
    %460 = vperm.xlu0 %459, %v410
    %v461 = vpop.permute.xlu0 %460
    %464 = vset.pattern.permute.xlu0 0
    %465 = vperm.xlu0 %464, %v411
    %v466 = vpop.permute.xlu0 %465
    %469 = vset.pattern.permute.xlu0 0
    %470 = vperm.xlu0 %469, %v412
    %v471 = vpop.permute.xlu0 %470
    %474 = vset.pattern.permute.xlu0 0
    %475 = vperm.xlu0 %474, %v413
    %v476 = vpop.permute.xlu0 %475
    %479 = vset.pattern.permute.xlu0 0
    %480 = vperm.xlu0 %479, %v414
    %v481 = vpop.permute.xlu0 %480
    %484 = vset.pattern.permute.xlu0 0
    %485 = vperm.xlu0 %484, %v415
    %v486 = vpop.permute.xlu0 %485
    %489 = vset.pattern.permute.xlu0 0
    %490 = vperm.xlu0 %489, %v416
    %v491 = vpop.permute.xlu0 %490
    %494 = vset.pattern.permute.xlu0 0
    %495 = vperm.xlu0 %494, %v417
    %v496 = vpop.permute.xlu0 %495
    %498 = vmatprep.subr.mxu0 %v355
    %499 = vmatpush1.msra.mxu0 %v354
    %500 = vmatprep.subr.mxu0 %v357
    %501 = vmatpush1.msra.mxu0 %v356
    %502 = vmatprep.subr.mxu0 %v359
    %503 = vmatpush1.msra.mxu0 %v358
    %504 = vmatprep.subr.mxu0 %v361
    %505 = vmatpush1.msra.mxu0 %v360
    %506 = vmatprep.subr.mxu0 %v363
    %507 = vmatpush1.msra.mxu0 %v362
    %508 = vmatprep.subr.mxu0 %v365
    %509 = vmatpush1.msra.mxu0 %v364
    %510 = vmatprep.subr.mxu0 %v367
    %511 = vmatpush1.msra.mxu0 %v366
    %512 = vmatprep.subr.mxu0 %v369
    %513 = vmatpush1.msra.mxu0 %v368
    %514 = vmatprep.subr.mxu0 %v371
    %515 = vmatpush1.msra.mxu0 %v370
    %516 = vmatprep.subr.mxu0 %v373
    %517 = vmatpush1.msra.mxu0 %v372
    %518 = vmatprep.subr.mxu0 %v375
    %519 = vmatpush1.msra.mxu0 %v374
    %520 = vmatprep.subr.mxu0 %v377
    %521 = vmatpush1.msra.mxu0 %v376
    %522 = vmatprep.subr.mxu0 %v379
    %523 = vmatpush1.msra.mxu0 %v378
    %524 = vmatprep.subr.mxu0 %v381
    %525 = vmatpush1.msra.mxu0 %v380
    %526 = vmatprep.subr.mxu0 %v383
    %527 = vmatpush1.msra.mxu0 %v382
    %528 = vmatprep.subr.mxu0 %v385
    %529 = vmatpush1.msra.mxu0 %v384
    %530 = vmatprep.subr.mxu0 0.0
    %531 = vmatpush1.msra.mxu0 0.0
    %532 = vmatprep.subr.mxu0 0.0
    %533 = vmatpush1.msra.mxu0 0.0
    %534 = vmatprep.subr.mxu0 0.0
    %535 = vmatpush1.msra.mxu0 0.0
    %536 = vmatprep.subr.mxu0 0.0
    %537 = vmatpush1.msra.mxu0 0.0
    %538 = vmatprep.subr.mxu0 0.0
    %539 = vmatpush1.msra.mxu0 0.0
    %540 = vmatprep.subr.mxu0 0.0
    %541 = vmatpush1.msra.mxu0 0.0
    %542 = vmatprep.subr.mxu0 0.0
    %543 = vmatpush1.msra.mxu0 0.0
    %544 = vmatprep.subr.mxu0 0.0
    %545 = vmatpush1.msra.mxu0 0.0
    %546 = vmatprep.subr.mxu0 0.0
    %547 = vmatpush1.msra.mxu0 0.0
    %548 = vmatprep.subr.mxu0 0.0
    %549 = vmatpush1.msra.mxu0 0.0
    %550 = vmatprep.subr.mxu0 0.0
    %551 = vmatpush1.msra.mxu0 0.0
    %552 = vmatprep.subr.mxu0 0.0
    %553 = vmatpush1.msra.mxu0 0.0
    %554 = vmatprep.subr.mxu0 0.0
    %555 = vmatpush1.msra.mxu0 0.0
    %556 = vmatprep.subr.mxu0 0.0
    %557 = vmatpush1.msra.mxu0 0.0
    %558 = vmatprep.subr.mxu0 0.0
    %559 = vmatpush1.msra.mxu0 0.0
    %560 = vmatprep.subr.mxu0 0.0
    %561 = vmatpush1.msra.mxu0 0.0
    %562 = vmatprep.mubr.f32.mxu0 0.0
    %563 = vmatmul.mubr.f32.gmra.mrb[0].mxu0 %v386
    %v564 = vpop.f32.mrb[0].mxu0
    %v565 = vadd.f32 %v421, %v564
    %v566 = vpop.f32.mrb[0].mxu0
    %v567 = vadd.f32 %v421, %v566
    %568 = vmatprep.mubr.f32.mxu0 0.0
    %569 = vmatmul.mubr.f32.gmra.mrb[0].mxu0 %v387
    %v570 = vpop.f32.mrb[0].mxu0
    %v571 = vadd.f32 %v426, %v570
    %v572 = vpop.f32.mrb[0].mxu0
    %v573 = vadd.f32 %v426, %v572
    %574 = vmatprep.mubr.f32.mxu0 0.0
    %575 = vmatmul.mubr.f32.gmra.mrb[0].mxu0 %v388
    %v576 = vpop.f32.mrb[0].mxu0
    %v577 = vadd.f32 %v431, %v576
    %v578 = vpop.f32.mrb[0].mxu0
    %v579 = vadd.f32 %v431, %v578
    %580 = vmatprep.mubr.f32.mxu0 0.0
    %581 = vmatmul.mubr.f32.gmra.mrb[0].mxu0 %v389
    %v582 = vpop.f32.mrb[0].mxu0
    %v583 = vadd.f32 %v436, %v582
    %v584 = vpop.f32.mrb[0].mxu0
    %v585 = vadd.f32 %v436, %v584
    %586 = vmatprep.mubr.f32.mxu0 0.0
    %587 = vmatmul.mubr.f32.gmra.mrb[0].mxu0 %v390
    %v588 = vpop.f32.mrb[0].mxu0
    %v589 = vadd.f32 %v441, %v588
    %v590 = vpop.f32.mrb[0].mxu0
    %v591 = vadd.f32 %v441, %v590
    %592 = vmatprep.mubr.f32.mxu0 0.0
    %593 = vmatmul.mubr.f32.gmra.mrb[0].mxu0 %v391
    %v594 = vpop.f32.mrb[0].mxu0
    %v595 = vadd.f32 %v446, %v594
    %v596 = vpop.f32.mrb[0].mxu0
    %v597 = vadd.f32 %v446, %v596
    %598 = vmatprep.mubr.f32.mxu0 0.0
    %599 = vmatmul.mubr.f32.gmra.mrb[0].mxu0 %v392
    %v600 = vpop.f32.mrb[0].mxu0
    %v601 = vadd.f32 %v451, %v600
    %v602 = vpop.f32.mrb[0].mxu0
    %v603 = vadd.f32 %v451, %v602
    %604 = vmatprep.mubr.f32.mxu0 0.0
    %605 = vmatmul.mubr.f32.gmra.mrb[0].mxu0 %v393
    %v606 = vpop.f32.mrb[0].mxu0
    %v607 = vadd.f32 %v456, %v606
    %v608 = vpop.f32.mrb[0].mxu0
    %v609 = vadd.f32 %v456, %v608
    %610 = vmatprep.mubr.f32.mxu0 0.0
    %611 = vmatmul.mubr.f32.gmra.mrb[0].mxu0 %v394
    %v612 = vpop.f32.mrb[0].mxu0
    %v613 = vadd.f32 %v461, %v612
    %v614 = vpop.f32.mrb[0].mxu0
    %v615 = vadd.f32 %v461, %v614
    %616 = vmatprep.mubr.f32.mxu0 0.0
    %617 = vmatmul.mubr.f32.gmra.mrb[0].mxu0 %v395
    %v618 = vpop.f32.mrb[0].mxu0
    %v619 = vadd.f32 %v466, %v618
    %v620 = vpop.f32.mrb[0].mxu0
    %v621 = vadd.f32 %v466, %v620
    %622 = vmatprep.mubr.f32.mxu0 0.0
    %623 = vmatmul.mubr.f32.gmra.mrb[0].mxu0 %v396
    %v624 = vpop.f32.mrb[0].mxu0
    %v625 = vadd.f32 %v471, %v624
    %v626 = vpop.f32.mrb[0].mxu0
    %v627 = vadd.f32 %v471, %v626
    %628 = vmatprep.mubr.f32.mxu0 0.0
    %629 = vmatmul.mubr.f32.gmra.mrb[0].mxu0 %v397
    %v630 = vpop.f32.mrb[0].mxu0
    %v631 = vadd.f32 %v476, %v630
    %v632 = vpop.f32.mrb[0].mxu0
    %v633 = vadd.f32 %v476, %v632
    %634 = vmatprep.mubr.f32.mxu0 0.0
    %635 = vmatmul.mubr.f32.gmra.mrb[0].mxu0 %v398
    %v636 = vpop.f32.mrb[0].mxu0
    %v637 = vadd.f32 %v481, %v636
    %v638 = vpop.f32.mrb[0].mxu0
    %v639 = vadd.f32 %v481, %v638
    %640 = vmatprep.mubr.f32.mxu0 0.0
    %641 = vmatmul.mubr.f32.gmra.mrb[0].mxu0 %v399
    %v642 = vpop.f32.mrb[0].mxu0
    %v643 = vadd.f32 %v486, %v642
    %v644 = vpop.f32.mrb[0].mxu0
    %v645 = vadd.f32 %v486, %v644
    %646 = vmatprep.mubr.f32.mxu0 0.0
    %647 = vmatmul.mubr.f32.gmra.mrb[0].mxu0 %v400
    %v648 = vpop.f32.mrb[0].mxu0
    %v649 = vadd.f32 %v491, %v648
    %v650 = vpop.f32.mrb[0].mxu0
    %v651 = vadd.f32 %v491, %v650
    %652 = vmatprep.mubr.f32.mxu0 0.0
    %653 = vmatmul.mubr.f32.gmra.mrb[0].mxu0 %v401
    %v654 = vpop.f32.mrb[0].mxu0
    %v655 = vadd.f32 %v496, %v654
    %v656 = vpop.f32.mrb[0].mxu0
    %v657 = vadd.f32 %v496, %v656
    %658 = vdwg.mxu0
    %v659 = vtanh.pop %v565
    %v660 = vtanh.pop %v567
    %v661 = vtanh.pop %v571
    %v662 = vtanh.pop %v573
    %v663 = vtanh.pop %v577
    %v664 = vtanh.pop %v579
    %v665 = vtanh.pop %v583
    %v666 = vtanh.pop %v585
    %v667 = vtanh.pop %v589
    %v668 = vtanh.pop %v591
    %v669 = vtanh.pop %v595
    %v670 = vtanh.pop %v597
    %v671 = vtanh.pop %v601
    %v672 = vtanh.pop %v603
    %v673 = vtanh.pop %v607
    %v674 = vtanh.pop %v609
    %v675 = vtanh.pop %v613
    %v676 = vtanh.pop %v615
    %v677 = vtanh.pop %v619
    %v678 = vtanh.pop %v621
    %v679 = vtanh.pop %v625
    %v680 = vtanh.pop %v627
    %v681 = vtanh.pop %v631
    %v682 = vtanh.pop %v633
    %v683 = vtanh.pop %v637
    %v684 = vtanh.pop %v639
    %v685 = vtanh.pop %v643
    %v686 = vtanh.pop %v645
    %v687 = vtanh.pop %v649
    %v688 = vtanh.pop %v651
    %v689 = vtanh.pop %v655
    %v690 = vtanh.pop %v657
    %v691 = vld [vmem:[%s5] sm:$0x1]
    %692 = vmatprep.subr.mxu0 %v660
    %693 = vmatpush1.msra.mxu0 %v659
    %694 = vmatprep.subr.mxu0 %v662
    %695 = vmatpush1.msra.mxu0 %v661
    %696 = vmatprep.subr.mxu0 %v664
    %697 = vmatpush1.msra.mxu0 %v663
    %698 = vmatprep.subr.mxu0 %v666
    %699 = vmatpush1.msra.mxu0 %v665
    %700 = vmatprep.subr.mxu0 %v668
    %701 = vmatpush1.msra.mxu0 %v667
    %702 = vmatprep.subr.mxu0 %v670
    %703 = vmatpush1.msra.mxu0 %v669
    %704 = vmatprep.subr.mxu0 %v672
    %705 = vmatpush1.msra.mxu0 %v671
    %706 = vmatprep.subr.mxu0 %v674
    %707 = vmatpush1.msra.mxu0 %v673
    %708 = vmatprep.subr.mxu0 %v676
    %709 = vmatpush1.msra.mxu0 %v675
    %710 = vmatprep.subr.mxu0 %v678
    %711 = vmatpush1.msra.mxu0 %v677
    %712 = vmatprep.subr.mxu0 %v680
    %713 = vmatpush1.msra.mxu0 %v679
    %714 = vmatprep.subr.mxu0 %v682
    %715 = vmatpush1.msra.mxu0 %v681
    %716 = vmatprep.subr.mxu0 %v684
    %717 = vmatpush1.msra.mxu0 %v683
    %718 = vmatprep.subr.mxu0 %v686
    %719 = vmatpush1.msra.mxu0 %v685
    %720 = vmatprep.subr.mxu0 %v688
    %721 = vmatpush1.msra.mxu0 %v687
    %722 = vmatprep.subr.mxu0 %v690
    %723 = vmatpush1.msra.mxu0 %v689
    %724 = vmatprep.subr.mxu0 0.0
    %725 = vmatpush1.msra.mxu0 0.0
    %726 = vmatprep.subr.mxu0 0.0
    %727 = vmatpush1.msra.mxu0 0.0
    %728 = vmatprep.subr.mxu0 0.0
    %729 = vmatpush1.msra.mxu0 0.0
    %730 = vmatprep.subr.mxu0 0.0
    %731 = vmatpush1.msra.mxu0 0.0
    %732 = vmatprep.subr.mxu0 0.0
    %733 = vmatpush1.msra.mxu0 0.0
    %734 = vmatprep.subr.mxu0 0.0
    %735 = vmatpush1.msra.mxu0 0.0
    %736 = vmatprep.subr.mxu0 0.0
    %737 = vmatpush1.msra.mxu0 0.0
    %738 = vmatprep.subr.mxu0 0.0
    %739 = vmatpush1.msra.mxu0 0.0
    %740 = vmatprep.subr.mxu0 0.0
    %741 = vmatpush1.msra.mxu0 0.0
    %742 = vmatprep.subr.mxu0 0.0
    %743 = vmatpush1.msra.mxu0 0.0
    %744 = vmatprep.subr.mxu0 0.0
    %745 = vmatpush1.msra.mxu0 0.0
    %746 = vmatprep.subr.mxu0 0.0
    %747 = vmatpush1.msra.mxu0 0.0
    %748 = vmatprep.subr.mxu0 0.0
    %749 = vmatpush1.msra.mxu0 0.0
    %750 = vmatprep.subr.mxu0 0.0
    %751 = vmatpush1.msra.mxu0 0.0
    %752 = vmatprep.subr.mxu0 0.0
    %753 = vmatpush1.msra.mxu0 0.0
    %754 = vmatprep.subr.mxu0 0.0
    %755 = vmatpush1.msra.mxu0 0.0
    %756 = vmatprep.mubr.f32.mxu0 0.0
    %757 = vmatmul.mubr.f32.gmra.mrb[0].mxu0 %v691
    %v758 = vpop.f32.mrb[0].mxu0
    %v759 = vadd.f32 0.0, %v758
    %v760 = vpop.f32.mrb[0].mxu0
    %v761 = vadd.f32 0.0, %v760
    %762 = vdwg.mxu0
    %v765 = vcombine.low %v759, %v761
    %v767 = vunpack.c.l.s4 1966171168
    %v768 = vunpack.c.0.s8 %v767
    %v769 = vlaneseq
    %v770 = vshrl.u32 %v769, 7
    %v771 = vsub.s32 %v768, %v770
    %v772 = vrot.slane %v765, %v771
    %v774 = vunpack.c.l.s4 1966171168
    %v775 = vunpack.c.0.s8 %v774
    %v776 = vlaneseq
    %v777 = vshrl.u32 %v776, 7
    %v778 = vsub.s32 %v775, %v777
    %v779 = vrot.slane %v772, %v778
    %v781 = vlaneseq
    %vm782 = vcmp.ge.s32.totalorder %v781, 0
    %vm783 = vcmp.lt.s32.totalorder %v781, 256
    %vm784 = vmand %vm782, %vm783
    %785 = vst.msk [vmem:[#allocation2] sm:$0x3] %vm784, %v779
    // Predicated region
    $region26: #{tpu_custom_call.1} parent=1 // pred_check
      _
    $region27: #{tpu_custom_call.1} parent=1 // pred_check_branch
      %787 = sbr.rel (0) target = $region29
    $region28: #{tpu_custom_call.1} parent=1 // pred_region
      %s789 = ssub.s32 32, 32
      %790 = vsyncadd [#allocation3], %s789
      %s792 = sshll.u32 [#allocation2], 4
      %s793 = int_to_ptr.vmem [resolvable:$true] %s792
      %795 = dma.vmem_to_hbm [thread:$0]  %s793, 32, %s6, [#allocation3]
    $region29: #{tpu_custom_call.1} parent=1 // pred_fallthru
      _
    // Predicated region
    $region30: #{tpu_custom_call.1} parent=1 // pred_check
      _
    $region31: #{tpu_custom_call.1} parent=1 // pred_check_branch
      %797 = sbr.rel (0) target = $region33
    $region32: #{tpu_custom_call.1} parent=1 // pred_region
      %798 = dma.done [#allocation3], 32
    $region33: #{tpu_custom_call.1} parent=1 // pred_fallthru
      _
    %799 = vsyncpa [#allocation3], 1

</llo_original>
